<compile_context>
chip_gen: v7x
topology: tpu7x:2x2x1
jax: 0.10.0
libtpu: 0.0.40
codegen_flags: <defaults>
</compile_context>

<pallas_src>
import jax
import jax.numpy as jnp
from jax.experimental import pallas as pl
from jax.experimental.pallas import tpu as pltpu


def _round_up(x, m):
    return (x + m - 1) // m * m


def _residual_linear_kernel(x_ref, w_ref, b_ref, o_ref):
    # x_ref: (TM, TK) f32  x tile        indexed by (i, k)  -> MXU + residual
    # w_ref: (TK, TN) bf16 weight tile   indexed by (k, j)
    # b_ref: (1,  TN) f32  bias tile     indexed by (0, j)
    # o_ref: (TM, TN) f32  output tile   indexed by (i, j)  -> resident across k
    j = pl.program_id(1)
    k = pl.program_id(2)

    @pl.when(k == 0)
    def _init():
        # Fold the bias into the accumulator init (broadcast over rows).
        o_ref[...] = jnp.broadcast_to(b_ref[...], o_ref.shape)

    @pl.when(k == j)
    def _residual():
        # TK == TN and W is square, so the x tile at k == j is exactly the
        # residual tile of output block (i, j).  Added in full f32.
        o_ref[...] += x_ref[...]

    # bf16 operands feed the MXU; accumulation stays f32 directly in the
    # resident output block (no separate scratch accumulator needed).
    o_ref[...] += jnp.dot(
        x_ref[...].astype(jnp.bfloat16),
        w_ref[...],
        preferred_element_type=jnp.float32,
    )


def residual_linear(x, w, b):
    """y = x + (x @ w + b), fused tiled Pallas kernel (bf16 MXU, f32 accum).

    x: (B, S, H) float32
    w: (H, H)    float32  (pre-transposed so x @ w == x @ W^T of nn.Linear)
    b: (H,)      float32
    """
    B, S, H = x.shape
    M = B * S
    dtype = x.dtype

    # ---- tile sizes --------------------------------------------------------
    # Lane axis padded to a multiple of 128.  TN == TK (square tiles) is
    # required for the k == j residual reuse; prefer 512-wide tiles to
    # amortize per-grid-step overhead and operand re-streaming.
    Hp = _round_up(H, 128)
    if Hp % 512 == 0:
        TN = 512
    elif Hp % 256 == 0:
        TN = 256
    else:
        TN = 128
    TK = TN

    # Row axis: biggest tile up to 512 that wastes <= ~12.5% padding.
    Mp0 = _round_up(M, 8)
    TM = 8
    for cand in (512, 256, 128, 64, 32, 16, 8):
        if cand <= Mp0 and (_round_up(Mp0, cand) - Mp0) * 8 <= Mp0:
            TM = cand
            break
    Mp = _round_up(Mp0, TM)

    # Megacore (v7x = 2 TCs): if the row axis collapses to a single tile, keep
    # at least 2 iterations on the output-column "parallel" axis when possible.
    while Mp // TM == 1 and Hp // TN < 2 and TN > 128:
        TN //= 2
        TK = TN

    # ---- pad operands (zero padding keeps the math exact after slicing) ----
    x2d = x.reshape(M, H).astype(jnp.float32)
    if (Mp, Hp) != (M, H):
        x2d = jnp.pad(x2d, ((0, Mp - M), (0, Hp - H)))
    w_p = jnp.pad(w, ((0, Hp - H), (0, Hp - H))) if Hp != H else w
    w_bf16 = w_p.astype(jnp.bfloat16)          # MXU is bf16-native on v5e/v6e/v7x
    b2d = (jnp.pad(b, (0, Hp - H)) if Hp != H else b).reshape(1, Hp)
    b2d = b2d.astype(jnp.float32)

    grid_m, grid_n, grid_k = Mp // TM, Hp // TN, Hp // TK
    grid = (grid_m, grid_n, grid_k)

    # Accurate streaming estimate: x is re-read once per output-column block,
    # W (bf16) once per row block, bias once per row block, output written once.
    cost = pl.CostEstimate(
        flops=2 * Mp * Hp * Hp,
        transcendentals=0,
        bytes_accessed=(
            Mp * Hp * 4 * grid_n      # x (f32)
            + Hp * Hp * 2 * grid_m    # W (bf16)
            + Hp * 4 * grid_m         # bias
            + Mp * Hp * 4             # output
        ),
    )

    # VMEM budget: double-buffered x / W / bias / out blocks; keep a safe cap
    # under v7x's 64 MiB physical VMEM.
    vmem_bytes = 2 * (TM * TK * 4 + TK * TN * 2 + TN * 4 + TM * TN * 4)
    vmem_limit = int(min(max(2 * vmem_bytes, 16 * 2**20), 48 * 2**20))

    out = pl.pallas_call(
        _residual_linear_kernel,
        out_shape=jax.ShapeDtypeStruct((Mp, Hp), jnp.float32),
        grid=grid,
        in_specs=[
            # x tile: feeds the MXU every step and the residual add at k == j.
            pl.BlockSpec((TM, TK), lambda i, j, k: (i, k)),
            # weight tile (bf16): (k, j)
            pl.BlockSpec((TK, TN), lambda i, j, k: (k, j)),
            # bias tile: (0, j)
            pl.BlockSpec((1, TN), lambda i, j, k: (0, j)),
        ],
        out_specs=pl.BlockSpec((TM, TN), lambda i, j, k: (i, j)),
        compiler_params=pltpu.CompilerParams(
            dimension_semantics=("parallel", "parallel", "arbitrary"),
            vmem_limit_bytes=vmem_limit,
        ),
        cost_estimate=cost,
    )(x2d, w_bf16, b2d)

    if (Mp, Hp) != (M, H):
        out = out[:M, :H]
    return out.reshape(B, S, H).astype(dtype)


if __name__ == "__main__":
    key = jax.random.PRNGKey(0)
    kx, kw, kb = jax.random.split(key, 3)

    B, S, H = 2, 8, 32
    x = jax.random.normal(kx, (B, S, H), dtype=jnp.float32)

    # Deterministic "nn.Linear(H, H)" parameters (W stored pre-transposed so
    # that the kernel computes x @ w == x @ W^T).
    bound = 1.0 / (H ** 0.5)
    w = jax.random.uniform(kw, (H, H), jnp.float32, -bound, bound)
    b = jax.random.uniform(kb, (H,), jnp.float32, -bound, bound)

    y = residual_linear(x, w, b)
    jax.block_until_ready(y)

    # f32 reference.  The MXU operands are fed in bf16 (accumulation, bias and
    # residual stay f32), so the tolerance is relaxed vs fp32 nn.Linear.
    y_ref = x + (jnp.einsum("bsh,hk->bsk", x, w) + b)
    assert jnp.allclose(y, y_ref, atol=2e-2, rtol=2e-2), "mismatch vs reference"

    print("KERNEL_OK")
</pallas_src>

<mosaic_0001>
module attributes {stable_mosaic.version = 11 : i64} {
  func.func @_residual_linear_kernel(%arg0: i32, %arg1: i32, %arg2: i32, %arg3: memref<16x128xf32, #tpu.memory_space<vmem>>, %arg4: memref<128x128xbf16, #tpu.memory_space<vmem>>, %arg5: memref<1x128xf32, #tpu.memory_space<vmem>>, %arg6: memref<16x128xf32, #tpu.memory_space<vmem>>) attributes {dimension_semantics = [#tpu.dimension_semantics<parallel>, #tpu.dimension_semantics<parallel>, #tpu.dimension_semantics<arbitrary>], iteration_bounds = array<i64: 1, 1, 1>, scalar_prefetch = 0 : i64, scratch_operands = 0 : i64, tpu.core_type = #tpu.core_type<tc>, window_params = [{transform_indices = @transform_0, window_bounds = array<i64: 16, 128>}, {transform_indices = @transform_1, window_bounds = array<i64: 128, 128>}, {transform_indices = @transform_2, window_bounds = array<i64: 1, 128>}, {transform_indices = @transform_3, window_bounds = array<i64: 16, 128>}]} {
    %c0_i32 = arith.constant 0 : i32
    %0 = arith.cmpi eq, %arg2, %c0_i32 : i32
    %1 = arith.extui %0 : i1 to i32
    %c0_i32_0 = arith.constant 0 : i32
    %2 = arith.cmpi ne, %1, %c0_i32_0 : i32
    scf.if %2 {
      %c0_9 = arith.constant 0 : index
      %c0_10 = arith.constant 0 : index
      %13 = vector.load %arg5[%c0_9, %c0_10] : memref<1x128xf32, #tpu.memory_space<vmem>>, vector<1x128xf32>
      %14 = vector.shape_cast %13 : vector<1x128xf32> to vector<1x128xf32>
      %15 = vector.broadcast %14 : vector<1x128xf32> to vector<16x128xf32>
      %c0_11 = arith.constant 0 : index
      %c0_12 = arith.constant 0 : index
      %16 = vector.load %arg6[%c0_11, %c0_12] : memref<16x128xf32, #tpu.memory_space<vmem>>, vector<16x128xf32>
      tpu.vector_store %arg6[%c0_11, %c0_12], %15 {strides = array<i32>} : memref<16x128xf32, #tpu.memory_space<vmem>>, vector<16x128xf32>,
    } else {
    }
    %3 = arith.cmpi eq, %arg2, %arg1 : i32
    %4 = arith.extui %3 : i1 to i32
    %c0_i32_1 = arith.constant 0 : i32
    %5 = arith.cmpi ne, %4, %c0_i32_1 : i32
    scf.if %5 {
      %c0_9 = arith.constant 0 : index
      %c0_10 = arith.constant 0 : index
      %13 = vector.load %arg6[%c0_9, %c0_10] : memref<16x128xf32, #tpu.memory_space<vmem>>, vector<16x128xf32>
      %c0_11 = arith.constant 0 : index
      %c0_12 = arith.constant 0 : index
      %14 = vector.load %arg3[%c0_11, %c0_12] : memref<16x128xf32, #tpu.memory_space<vmem>>, vector<16x128xf32>
      %15 = arith.addf %13, %14 : vector<16x128xf32>
      %c0_13 = arith.constant 0 : index
      %c0_14 = arith.constant 0 : index
      %16 = vector.load %arg6[%c0_13, %c0_14] : memref<16x128xf32, #tpu.memory_space<vmem>>, vector<16x128xf32>
      tpu.vector_store %arg6[%c0_13, %c0_14], %15 {strides = array<i32>} : memref<16x128xf32, #tpu.memory_space<vmem>>, vector<16x128xf32>,
    } else {
    }
    %c0 = arith.constant 0 : index
    %c0_2 = arith.constant 0 : index
    %6 = vector.load %arg6[%c0, %c0_2] : memref<16x128xf32, #tpu.memory_space<vmem>>, vector<16x128xf32>
    %c0_3 = arith.constant 0 : index
    %c0_4 = arith.constant 0 : index
    %7 = vector.load %arg3[%c0_3, %c0_4] : memref<16x128xf32, #tpu.memory_space<vmem>>, vector<16x128xf32>
    %8 = arith.truncf %7 : vector<16x128xf32> to vector<16x128xbf16>
    %c0_5 = arith.constant 0 : index
    %c0_6 = arith.constant 0 : index
    %9 = vector.load %arg4[%c0_5, %c0_6] : memref<128x128xbf16, #tpu.memory_space<vmem>>, vector<128x128xbf16>
    %cst = arith.constant dense<0.000000e+00> : vector<16x128xf32>
    %10 = tpu.matmul %8, %9, %cst {dimension_numbers = #tpu.dot_dimension_numbers<[1], [0], [0], [1], [0, 0, 1, 1], [], []>} : vector<16x128xbf16>, vector<128x128xbf16>, vector<16x128xf32> -> vector<16x128xf32>
    %11 = arith.addf %6, %10 : vector<16x128xf32>
    %c0_7 = arith.constant 0 : index
    %c0_8 = arith.constant 0 : index
    %12 = vector.load %arg6[%c0_7, %c0_8] : memref<16x128xf32, #tpu.memory_space<vmem>>, vector<16x128xf32>
    tpu.vector_store %arg6[%c0_7, %c0_8], %11 {strides = array<i32>} : memref<16x128xf32, #tpu.memory_space<vmem>>, vector<16x128xf32>,
    return
  }
  func.func @transform_0(%arg0: i32, %arg1: i32, %arg2: i32) -> (i32, i32) {
    %c0_i32 = arith.constant 0 : i32
    return %arg0, %arg2 : i32, i32
  }
  func.func @transform_1(%arg0: i32, %arg1: i32, %arg2: i32) -> (i32, i32) {
    %c0_i32 = arith.constant 0 : i32
    return %arg2, %arg1 : i32, i32
  }
  func.func @transform_2(%arg0: i32, %arg1: i32, %arg2: i32) -> (i32, i32) {
    %c0_i32 = arith.constant 0 : i32
    %c0_i32_0 = arith.constant 0 : i32
    return %c0_i32, %arg1 : i32, i32
  }
  func.func @transform_3(%arg0: i32, %arg1: i32, %arg2: i32) -> (i32, i32) {
    %c0_i32 = arith.constant 0 : i32
    return %arg0, %arg1 : i32, i32
  }
}

</mosaic_0001>

<llo_original>
// kernel: tpu_custom_call.1
$region0: #{tpu_custom_call.1}
  #allocation0 [shape = 'u32[]', space=smem, size = 0x4, offset = 0x4, fixed_abs, tag = 'smem constant byte address 0x4 - core index']
  #allocation1 [shape = 'u32[144,128]{1,0:T(1,128)}', space=vmem, size = 0x12000, scoped, tag = 'internal scratch']
  %s0 = inlined_call_operand.hbm [shape: f32[16,128], index: 0, kind: input, shape index: {}]
  %s1 = inlined_call_operand.hbm [shape: bf16[128,128], index: 1, kind: input, shape index: {}]
  %s2 = inlined_call_operand.vmem [shape: f32[1,128], index: 2, kind: input, shape index: {}]
  %s3 = inlined_call_operand.hbm [shape: f32[16,128], index: 3, kind: output, shape index: {}]
  %s4 = sld [smem:[#allocation0]]
  $region38: #{tpu_custom_call.1} parent=0
    _
  %s6 = ssub.s32 1, %s4
  %s7 = scalar_select 0, %s6, %s4
  $region1: #{tpu_custom_call.1} parent=0
    #allocation2 [shape = 'u8[8192]{0}', space=vmem, size = 0x2000, scoped, tag = 'input window, operand 0, single buffered']
    #allocation3 [shape = 's32[1]{0}', space=sflag, size = 0x4, scoped, tag = 'scoped memory for tpu_custom_call.1']
    #allocation4 [shape = 's32[1]{0}', space=sflag, size = 0x4, scoped, tag = 'scoped memory for tpu_custom_call.1']
    #allocation5 [shape = 'u8[32768]{0}', space=vmem, size = 0x8000, scoped, tag = 'input window, operand 1, single buffered']
    #allocation6 [shape = 's32[1]{0}', space=sflag, size = 0x4, scoped, tag = 'scoped memory for tpu_custom_call.1']
    #allocation7 [shape = 'u8[8192]{0}', space=vmem, size = 0x2000, scoped, tag = 'output window, operand 0, single buffered']
    %8 = vsyncpa [#allocation3], 0
    %9 = vsyncpa [#allocation6], 0
    %10 = vsyncpa [#allocation4], 0
    // Predicated region
    $region2: #{tpu_custom_call.1} parent=1 // pred_check
      _
    $region3: #{tpu_custom_call.1} parent=1 // pred_check_branch
      %12 = sbr.rel (0) target = $region5
    $region4: #{tpu_custom_call.1} parent=1 // pred_region
      %s14 = ssub.s32 256, 256
      %15 = vsyncadd [#allocation3], %s14
      %s16 = sshll.u32 [#allocation2], 4
      %s17 = int_to_ptr.vmem [resolvable:$true] %s16
      %22 = dma.hbm_to_vmem [thread:$0]  %s0, 256, %s17, [#allocation3], 128, 128, 8
    $region5: #{tpu_custom_call.1} parent=1 // pred_fallthru
      _
    // Predicated region
    $region6: #{tpu_custom_call.1} parent=1 // pred_check
      _
    $region7: #{tpu_custom_call.1} parent=1 // pred_check_branch
      %24 = sbr.rel (0) target = $region9
    $region8: #{tpu_custom_call.1} parent=1 // pred_region
      %s26 = ssub.s32 1024, 1024
      %27 = vsyncadd [#allocation6], %s26
      %s28 = sshll.u32 [#allocation5], 4
      %s29 = int_to_ptr.vmem [resolvable:$true] %s28
      %34 = dma.hbm_to_vmem [thread:$0]  %s1, 1024, %s29, [#allocation6], 64, 64, 4
    $region9: #{tpu_custom_call.1} parent=1 // pred_fallthru
      _
    // Predicated region
    $region10: #{tpu_custom_call.1} parent=1 // pred_check
      _
    $region11: #{tpu_custom_call.1} parent=1 // pred_check_branch
      %36 = sbr.rel (0) target = $region13
    $region12: #{tpu_custom_call.1} parent=1 // pred_region
      _
    $region13: #{tpu_custom_call.1} parent=1 // pred_fallthru
      _
    // Predicated region
    $region14: #{tpu_custom_call.1} parent=1 // pred_check
      _
    $region15: #{tpu_custom_call.1} parent=1 // pred_check_branch
      %38 = sbr.rel (0) target = $region17
    $region16: #{tpu_custom_call.1} parent=1 // pred_region
      %39 = dma.done [#allocation3], 256
    $region17: #{tpu_custom_call.1} parent=1 // pred_fallthru
      _
    // Predicated region
    $region18: #{tpu_custom_call.1} parent=1 // pred_check
      _
    $region19: #{tpu_custom_call.1} parent=1 // pred_check_branch
      %41 = sbr.rel (0) target = $region21
    $region20: #{tpu_custom_call.1} parent=1 // pred_region
      %42 = dma.done [#allocation6], 1024
    $region21: #{tpu_custom_call.1} parent=1 // pred_fallthru
      _
    %p44 = scmp.eq.s32.totalorder 0, 0
    // Predicated region
    $region22: #{tpu_custom_call.1} parent=1 // pred_check
      %p45 = pneg %p44
    $region23: #{tpu_custom_call.1} parent=1 // pred_check_branch
      %47 = sbr.rel (%p45) target = $region25
    $region24: #{tpu_custom_call.1} parent=1 // pred_region
      %v48 = vld [vmem:[%s2] sm:$0x1]
      %v50 = vlaneseq
      %v51 = vshrl.u32 %v50, 7
      %v52 = vsub.s32 0, %v51
      %v53 = vrot.slane %v48, %v52
      %55 = vst [vmem:[#allocation7] sm:$0xff] %v53
      %56 = vst [vmem:[#allocation7 + $0x8] sm:$0xff] %v53
    $region25: #{tpu_custom_call.1} parent=1 // pred_fallthru
      _
    %p57 = scmp.eq.s32.totalorder 0, 0
    // Predicated region
    $region26: #{tpu_custom_call.1} parent=1 // pred_check
      %p58 = pneg %p57
    $region27: #{tpu_custom_call.1} parent=1 // pred_check_branch
      %60 = sbr.rel (%p58) target = $region29
    $region28: #{tpu_custom_call.1} parent=1 // pred_region
      %v61 = vld [vmem:[#allocation7] sm:$0xff]
      %v62 = vld [vmem:[#allocation7 + $0x8] sm:$0xff]
      %v63 = vld [vmem:[#allocation2] sm:$0xff]
      %v64 = vld [vmem:[#allocation2 + $0x8] sm:$0xff]
      %v65 = vadd.f32 %v61, %v63
      %v66 = vadd.f32 %v62, %v64
      %67 = vst [vmem:[#allocation7] sm:$0xff] %v65
      %68 = vst [vmem:[#allocation7 + $0x8] sm:$0xff] %v66
    $region29: #{tpu_custom_call.1} parent=1 // pred_fallthru
      _
    %v69 = vld [vmem:[#allocation7] sm:$0xff]
    %v70 = vld [vmem:[#allocation7 + $0x8] sm:$0xff]
    %v71 = vld [vmem:[#allocation2] sm:$0xff]
    %v72 = vld [vmem:[#allocation2 + $0x8] sm:$0xff]
    %v73 = vpack.c.bf16 %v72, %v71
    %v74 = vld [vmem:[#allocation5] sm:$0xf]
    %v75 = vld [vmem:[#allocation5 + $0x4] sm:$0xf]
    %v76 = vld [vmem:[#allocation5 + $0x8] sm:$0xf]
    %v77 = vld [vmem:[#allocation5 + $0xc] sm:$0xf]
    %v78 = vld [vmem:[#allocation5 + $0x10] sm:$0xf]
    %v79 = vld [vmem:[#allocation5 + $0x14] sm:$0xf]
    %v80 = vld [vmem:[#allocation5 + $0x18] sm:$0xf]
    %v81 = vld [vmem:[#allocation5 + $0x1c] sm:$0xf]
    %v82 = vld [vmem:[#allocation5 + $0x20] sm:$0xf]
    %v83 = vld [vmem:[#allocation5 + $0x24] sm:$0xf]
    %v84 = vld [vmem:[#allocation5 + $0x28] sm:$0xf]
    %v85 = vld [vmem:[#allocation5 + $0x2c] sm:$0xf]
    %v86 = vld [vmem:[#allocation5 + $0x30] sm:$0xf]
    %v87 = vld [vmem:[#allocation5 + $0x34] sm:$0xf]
    %v88 = vld [vmem:[#allocation5 + $0x38] sm:$0xf]
    %v89 = vld [vmem:[#allocation5 + $0x3c] sm:$0xf]
    %v106 = vunpack.c.l.b16 %v74
    %v107 = vunpack.c.l.b16 %v75
    %v108 = vunpack.c.l.b16 %v76
    %v109 = vunpack.c.l.b16 %v77
    %v110 = vunpack.c.l.b16 %v78
    %v111 = vunpack.c.l.b16 %v79
    %v112 = vunpack.c.l.b16 %v80
    %v113 = vunpack.c.l.b16 %v81
    %v114 = vunpack.c.l.b16 %v82
    %v115 = vunpack.c.l.b16 %v83
    %v116 = vunpack.c.l.b16 %v84
    %v117 = vunpack.c.l.b16 %v85
    %v118 = vunpack.c.l.b16 %v86
    %v119 = vunpack.c.l.b16 %v87
    %v120 = vunpack.c.l.b16 %v88
    %v121 = vunpack.c.l.b16 %v89
    %v122 = vpack.c.b16 %v107, %v106
    %v123 = vpack.c.b16 %v109, %v108
    %v124 = vpack.c.b16 %v111, %v110
    %v125 = vpack.c.b16 %v113, %v112
    %v126 = vpack.c.b16 %v115, %v114
    %v127 = vpack.c.b16 %v117, %v116
    %v128 = vpack.c.b16 %v119, %v118
    %v129 = vpack.c.b16 %v121, %v120
    %138 = vmatprep.subr.bf16.mxu0 0
    %139 = vmatpush1.bf16.msra.mxu0 %v122
    %140 = vmatprep.subr.bf16.mxu0 0
    %141 = vmatpush1.bf16.msra.mxu0 %v123
    %142 = vmatprep.subr.bf16.mxu0 0
    %143 = vmatpush1.bf16.msra.mxu0 %v124
    %144 = vmatprep.subr.bf16.mxu0 0
    %145 = vmatpush1.bf16.msra.mxu0 %v125
    %146 = vmatprep.subr.bf16.mxu0 0
    %147 = vmatpush1.bf16.msra.mxu0 %v126
    %148 = vmatprep.subr.bf16.mxu0 0
    %149 = vmatpush1.bf16.msra.mxu0 %v127
    %150 = vmatprep.subr.bf16.mxu0 0
    %151 = vmatpush1.bf16.msra.mxu0 %v128
    %152 = vmatprep.subr.bf16.mxu0 0
    %153 = vmatpush1.bf16.msra.mxu0 %v129
    %154 = vmatprep.subr.bf16.mxu0 0
    %155 = vmatpush1.bf16.msra.mxu0 0
    %156 = vmatprep.subr.bf16.mxu0 0
    %157 = vmatpush1.bf16.msra.mxu0 0
    %158 = vmatprep.subr.bf16.mxu0 0
    %159 = vmatpush1.bf16.msra.mxu0 0
    %160 = vmatprep.subr.bf16.mxu0 0
    %161 = vmatpush1.bf16.msra.mxu0 0
    %162 = vmatprep.subr.bf16.mxu0 0
    %163 = vmatpush1.bf16.msra.mxu0 0
    %164 = vmatprep.subr.bf16.mxu0 0
    %165 = vmatpush1.bf16.msra.mxu0 0
    %166 = vmatprep.subr.bf16.mxu0 0
    %167 = vmatpush1.bf16.msra.mxu0 0
    %168 = vmatprep.subr.bf16.mxu0 0
    %169 = vmatpush1.bf16.msra.mxu0 0
    %170 = vmatprep.mubr.bf16.mxu0 0
    %171 = vmatmul.mubr.bf16.gmra.mrb[0].mxu0 %v73
    %v172 = vpop.f32.mrb[0].mxu0
    %v173 = vadd.f32 0.0, %v172
    %v174 = vpop.f32.mrb[0].mxu0
    %v175 = vpop.f32.mrb[0].mxu0
    %v176 = vadd.f32 0.0, %v175
    %v177 = vpop.f32.mrb[0].mxu0
    %178 = vdwg.mxu0
    %v179 = vadd.f32 %v69, %v173
    %v180 = vadd.f32 %v70, %v176
    %181 = vst [vmem:[#allocation7] sm:$0xff] %v179
    %182 = vst [vmem:[#allocation7 + $0x8] sm:$0xff] %v180
    // Predicated region
    $region30: #{tpu_custom_call.1} parent=1 // pred_check
      _
    $region31: #{tpu_custom_call.1} parent=1 // pred_check_branch
      %184 = sbr.rel (0) target = $region33
    $region32: #{tpu_custom_call.1} parent=1 // pred_region
      %s186 = ssub.s32 256, 256
      %187 = vsyncadd [#allocation4], %s186
      %s188 = sshll.u32 [#allocation7], 4
      %s189 = int_to_ptr.vmem [resolvable:$true] %s188
      %194 = dma.vmem_to_hbm [thread:$0]  %s189, 256, %s3, [#allocation4], 128, 128, 8
    $region33: #{tpu_custom_call.1} parent=1 // pred_fallthru
      _
    // Predicated region
    $region34: #{tpu_custom_call.1} parent=1 // pred_check
      _
    $region35: #{tpu_custom_call.1} parent=1 // pred_check_branch
      %196 = sbr.rel (0) target = $region37
    $region36: #{tpu_custom_call.1} parent=1 // pred_region
      %197 = dma.done [#allocation4], 256
    $region37: #{tpu_custom_call.1} parent=1 // pred_fallthru
      _
    %198 = vsyncpa [#allocation3], 1
    %199 = vsyncpa [#allocation6], 1
    %200 = vsyncpa [#allocation4], 1

</llo_original>
